<compile_context>
chip_gen: v5e
topology: v5e:2x2
jax: 0.10.0
libtpu: 0.0.40
codegen_flags: <defaults>
</compile_context>

<pallas_src>
import functools

import jax
import jax.numpy as jnp
from jax import lax
from jax.experimental import pallas as pl
from jax.experimental.pallas import tpu as pltpu

EPS = 1e-5
LANES = 128
ROW_ALIGN = 16          # sublane alignment quantum for bf16 row windows
TM_TARGET = 512         # target Mg (flattened spatial) tile rows


def _round_up(x, m):
    return (x + m - 1) // m * m


@functools.lru_cache(maxsize=1)
def _vmem_limit_bytes():
    """Per-generation VMEM cap: ~100 MiB on v5e/v6e (128 MiB phys), ~51 MiB on v7x."""
    cap = 64 * 1024 * 1024
    try:
        cap = int(pltpu.get_tpu_info().vmem_capacity_bytes)
    except Exception:
        pass
    return int(min(int(cap * 0.8), 110 * 1024 * 1024))


# ----------------------------- Pallas kernel -----------------------------

def _build_conv_kernel(taps, n_phase, slab, tm, win, n_co, resid_mode, relu):
    """Fused conv (+BN shift) (+residual) (+relu) over one (Mg tile, Cout block).

    Grid = (batch, Mg tile, Cout block).  Refs per step:
      x_hbm : (N * n_phase * slab, Kp) bf16, raw HBM (memory_space=pl.ANY)
      w_ref : (n_taps, Kp, co_blk)     bf16, BN scale folded
      sh_ref: (1, co_blk)              f32, BN shift
      resid_mode == "conv": xd_ref (1, tm, Cdp) bf16, wd_ref (Cdp, co_blk) bf16,
                            shd_ref (1, co_blk) f32   (downsample 1x1x1 conv+BN)
      resid_mode == "add" : xd_ref (1, tm, co_blk) bf16 (identity residual)
      o_ref : (1, tm, co_blk)
      xbuf  : VMEM (n_phase, win, Kp) bf16 scratch (activation row windows)
      sem   : DMA semaphores (n_phase,)
    """

    def body(x_hbm, w_ref, sh_ref, o_ref, xbuf, sem,
             xd_ref=None, wd_ref=None, shd_ref=None):
        b = pl.program_id(0)
        m = pl.program_id(1)

        def fetch():
            # Pull this (batch, Mg tile)'s activation window (tile + halo rows)
            # for every stride-phase into VMEM; starts are 16-row aligned.
            base = b * (n_phase * slab) + m * tm
            copies = []
            for p in range(n_phase):
                start = pl.multiple_of(base + p * slab, ROW_ALIGN)
                dma = pltpu.make_async_copy(x_hbm.at[pl.ds(start, win), :],
                                            xbuf.at[p], sem.at[p])
                dma.start()
                copies.append(dma)
            for dma in copies:
                dma.wait()

        if n_co == 1:
            fetch()
        else:
            # Window depends only on (batch, Mg tile): fetch once per Cout sweep.
            pl.when(pl.program_id(2) == 0)(fetch)

        # 27 (or 1) MXU matmuls, chained register/MRB accumulation in f32
        # (no per-tap VMEM scratch round trips).
        acc = None
        for t, (p, row0) in enumerate(taps):
            lhs = xbuf[p, row0:row0 + tm, :]                       # (tm, Kp) bf16
            part = jnp.dot(lhs, w_ref[t], preferred_element_type=jnp.float32)
            acc = part if acc is None else acc + part

        out = acc + sh_ref[...]                                    # BN shift (f32)

        if resid_mode == "conv":     # downsample branch: 1x1x1 conv + BN shift
            out = out + jnp.dot(xd_ref[0], wd_ref[...],
                                preferred_element_type=jnp.float32) + shd_ref[...]
        elif resid_mode == "add":    # identity residual (bf16 -> f32 add)
            out = out + xd_ref[0].astype(jnp.float32)

        if relu:
            out = jnp.maximum(out, 0.0)
        o_ref[0] = out.astype(o_ref.dtype)

    if resid_mode == "conv":
        def kernel(x_hbm, w_ref, sh_ref, xd_ref, wd_ref, shd_ref, o_ref, xbuf, sem):
            body(x_hbm, w_ref, sh_ref, o_ref, xbuf, sem, xd_ref, wd_ref, shd_ref)
    elif resid_mode == "add":
        def kernel(x_hbm, w_ref, sh_ref, xd_ref, o_ref, xbuf, sem):
            body(x_hbm, w_ref, sh_ref, o_ref, xbuf, sem, xd_ref)
    else:
        def kernel(x_hbm, w_ref, sh_ref, o_ref, xbuf, sem):
            body(x_hbm, w_ref, sh_ref, o_ref, xbuf, sem)
    return kernel


# ----------------------------- pallas_call wrapper -----------------------------

def _conv3d_call(x2, w_taps, shift, meta, *, resid=None, wd=None, shd=None,
                 relu=True, out_dtype=jnp.bfloat16, co_blk=None):
    n, taps, n_phase = meta["n"], meta["taps"], meta["n_phase"]
    slab, tm, win = meta["slab"], meta["tm"], meta["win"]
    mg_p, n_mg = meta["mg_p"], meta["n_mg"]
    kp = x2.shape[-1]
    n_taps, _, cop = w_taps.shape
    if co_blk is None:
        # 256-wide output block when possible: full 2x256x256 MXU on v6e/v7x.
        co_blk = 2 * LANES if cop % (2 * LANES) == 0 else LANES
    co_blk = min(co_blk, cop)
    n_co = cop // co_blk
    resid_mode = None if resid is None else ("conv" if wd is not None else "add")

    kernel = _build_conv_kernel(taps, n_phase, slab, tm, win, n_co, resid_mode, relu)

    in_specs = [
        pl.BlockSpec(memory_space=pl.ANY),                              # activations (HBM)
        pl.BlockSpec((n_taps, kp, co_blk), lambda i, m, j: (0, 0, j)),  # folded tap weights
        pl.BlockSpec((1, co_blk), lambda i, m, j: (0, j)),              # BN shift
    ]
    operands = [x2, w_taps, shift]
    flops = 2 * n * mg_p * kp * cop * n_taps
    bytes_accessed = (x2.size * 2 + w_taps.size * 2 + shift.size * 4
                      + n * mg_p * cop * jnp.dtype(out_dtype).itemsize)

    if resid_mode == "conv":
        cdp = resid.shape[-1]
        in_specs += [
            pl.BlockSpec((1, tm, cdp), lambda i, m, j: (i, m, 0)),
            pl.BlockSpec((cdp, co_blk), lambda i, m, j: (0, j)),
            pl.BlockSpec((1, co_blk), lambda i, m, j: (0, j)),
        ]
        operands += [resid, wd, shd]
        flops += 2 * n * mg_p * cdp * cop
        bytes_accessed += resid.size * 2 + wd.size * 2 + shd.size * 4
    elif resid_mode == "add":
        in_specs += [pl.BlockSpec((1, tm, co_blk), lambda i, m, j: (i, m, j))]
        operands += [resid]
        bytes_accessed += resid.size * 2

    if n_co == 1:
        dim_sem = ("parallel", "parallel", "parallel")
    else:
        dim_sem = ("parallel", "parallel", "arbitrary")  # Cout sweep reuses VMEM window

    return pl.pallas_call(
        kernel,
        out_shape=jax.ShapeDtypeStruct((n, mg_p, cop), out_dtype),
        grid=(n, n_mg, n_co),
        in_specs=in_specs,
        out_specs=pl.BlockSpec((1, tm, co_blk), lambda i, m, j: (i, m, j)),
        scratch_shapes=[pltpu.VMEM((n_phase, win, kp), jnp.bfloat16),
                        pltpu.SemaphoreType.DMA((n_phase,))],
        compiler_params=pltpu.CompilerParams(
            dimension_semantics=dim_sem,
            vmem_limit_bytes=_vmem_limit_bytes()),
        cost_estimate=pl.CostEstimate(flops=int(flops), transcendentals=0,
                                      bytes_accessed=int(bytes_accessed)),
    )(*operands)


# ----------------------------- glue (plain JAX) -----------------------------

def _fold_bn(gamma, beta, mean, var):
    scale = gamma / jnp.sqrt(var + EPS)
    shift = beta - mean * scale
    return scale, shift


def _pack_w3(w, scale, cin_p, cout_p):
    """(O, I, 3, 3, 3) -> (27, cin_p, cout_p) bf16 with BN scale folded in."""
    o, i = w.shape[:2]
    wt = jnp.transpose(w, (2, 3, 4, 1, 0)).reshape(27, i, o) * scale[None, None, :]
    wt = jnp.pad(wt, ((0, 0), (0, cin_p - i), (0, cout_p - o)))
    return wt.astype(jnp.bfloat16)


def _pack_w_packed_k(w, scale, kp, cout_p):
    """(O, I, 3, 3, 3) -> (1, kp, cout_p) bf16: all 27 taps packed along K."""
    o, i = w.shape[:2]
    wt = jnp.transpose(w, (2, 3, 4, 1, 0)).reshape(27 * i, o) * scale[None, :]
    wt = jnp.pad(wt, ((0, kp - 27 * i), (0, cout_p - o)))
    return wt.astype(jnp.bfloat16)[None]


def _pack_shift(shift, cout_p):
    return jnp.pad(shift, (0, cout_p - shift.shape[0])).reshape(1, cout_p).astype(jnp.float32)


def _out_dims(d, h, w, s):
    return (d - 1) // s + 1, (h - 1) // s + 1, (w - 1) // s + 1


def _phase_flatten(x_cl, stride):
    """Spatially pad, phase-decompose (stride) and flatten to matmul row slabs.

    Returns x2 of shape (N * n_phase * slab, C): per (sample, phase) a slab whose
    first Mg = De*He*We rows are the flattened phase grid (every 3x3x3 tap is a
    static row shift < halo inside the slab) followed by zero rows; Mg is padded
    up to a multiple of the Mg tile `tm` and the halo to a 16-row boundary.
    """
    n, d, h, w, c = x_cl.shape
    s = stride
    do, ho, wo = _out_dims(d, h, w, s)
    ext = 2 // s
    de, he, we = do + ext, ho + ext, wo + ext
    mg = de * he * we
    halo = ext * (he * we + we + 1)                  # max tap row shift
    tm = min(TM_TARGET, _round_up(mg, ROW_ALIGN))    # Mg tile rows (multiple of 16)
    mg_p = _round_up(mg, tm)
    halo_p = _round_up(halo, ROW_ALIGN)
    win = tm + halo_p                                # DMA window rows per phase
    slab = mg_p + halo_p
    n_phase = s ** 3

    xp = jnp.pad(x_cl, ((0, 0), (1, 1), (1, 1), (1, 1), (0, 0)))
    slabs = []
    for pd in range(s):
        for ph in range(s):
            for pw in range(s):
                t = xp[:, pd::s, ph::s, pw::s, :][:, :de, :he, :we, :]
                t = jnp.pad(t, ((0, 0),
                                (0, de - t.shape[1]),
                                (0, he - t.shape[2]),
                                (0, we - t.shape[3]),
                                (0, 0)))
                t = t.reshape(n, mg, c)
                t = jnp.pad(t, ((0, 0), (0, slab - mg), (0, 0)))
                slabs.append(t)
    x2 = jnp.concatenate(slabs, axis=1) if len(slabs) > 1 else slabs[0]
    x2 = x2.reshape(n * n_phase * slab, c)

    taps = []
    for kd in range(3):
        for kh in range(3):
            for kw in range(3):
                p = ((kd % s) * s + (kh % s)) * s + (kw % s)
                row0 = (kd // s) * he * we + (kh // s) * we + (kw // s)
                taps.append((p, row0))

    meta = dict(n=n, taps=taps, n_phase=n_phase, slab=slab, tm=tm, win=win,
                mg=mg, mg_p=mg_p, n_mg=mg_p // tm,
                grid_dims=(de, he, we), out_dims=(do, ho, wo))
    return x2, meta


def _im2col_flatten(x_cl, stride):
    """Tiny-Cin fast path: pack all 27 taps along channels (1 matmul per tile)."""
    n, d, h, w, c = x_cl.shape
    s = stride
    do, ho, wo = _out_dims(d, h, w, s)
    xp = jnp.pad(x_cl, ((0, 0), (1, 1), (1, 1), (1, 1), (0, 0)))
    cols = []
    for kd in range(3):
        for kh in range(3):
            for kw in range(3):
                cols.append(xp[:, kd:kd + (do - 1) * s + 1:s,
                                  kh:kh + (ho - 1) * s + 1:s,
                                  kw:kw + (wo - 1) * s + 1:s, :])
    x_col = jnp.concatenate(cols, axis=-1)            # (N, do, ho, wo, 27*C)
    mg = do * ho * wo
    tm = min(TM_TARGET, _round_up(mg, ROW_ALIGN))
    mg_p = _round_up(mg, tm)
    slab = mg_p
    x2 = jnp.pad(x_col.reshape(n, mg, 27 * c), ((0, 0), (0, slab - mg), (0, 0)))
    x2 = x2.reshape(n * slab, 27 * c)
    meta = dict(n=n, taps=[(0, 0)], n_phase=1, slab=slab, tm=tm, win=tm,
                mg=mg, mg_p=mg_p, n_mg=mg_p // tm,
                grid_dims=(do, ho, wo), out_dims=(do, ho, wo))
    return x2, meta


def _pad_rows_to_grid(x_valid, grid_dims, rows_p):
    """(N, dv, hv, wv, C) -> (N, rows_p, C): zero-pad to grid dims, flatten rows."""
    n, dv, hv, wv, c = x_valid.shape
    de, he, we = grid_dims
    t = jnp.pad(x_valid, ((0, 0), (0, de - dv), (0, he - hv), (0, we - wv), (0, 0)))
    t = t.reshape(n, de * he * we, c)
    return jnp.pad(t, ((0, 0), (0, rows_p - de * he * we), (0, 0)))


def block3d_forward(x_ncdhw, params, stride):
    # NCDHW -> NDHWC (channels on lanes).
    x = jnp.transpose(x_ncdhw, (0, 2, 3, 4, 1))
    n, d, h, w, cin = x.shape
    planes = params["w1"].shape[0]
    cop = _round_up(planes, LANES)
    has_ds = (stride != 1) or (cin != planes)
    x_bf = x.astype(jnp.bfloat16)

    # ---- conv1 + bn1 + relu ----
    s1, b1 = _fold_bn(params["g1"], params["b1"], params["m1"], params["v1"])
    if 27 * cin <= LANES:
        # tiny Cin: pack all taps along K -> one matmul per tile instead of 27
        x1, meta1 = _im2col_flatten(x_bf, stride)
        kp1 = _round_up(27 * cin, LANES)
        x1 = jnp.pad(x1, ((0, 0), (0, kp1 - 27 * cin)))
        w1 = _pack_w_packed_k(params["w1"], s1, kp1, cop)
    else:
        cin_p = _round_up(cin, LANES)
        x1, meta1 = _phase_flatten(
            jnp.pad(x_bf, ((0, 0),) * 4 + ((0, cin_p - cin),)), stride)
        w1 = _pack_w3(params["w1"], s1, cin_p, cop)
    sh1 = _pack_shift(b1, cop)
    out1 = _conv3d_call(x1, w1, sh1, meta1, relu=True, out_dtype=jnp.bfloat16)
    de1, he1, we1 = meta1["grid_dims"]
    do, ho, wo = meta1["out_dims"]
    out1 = (out1[:, :de1 * he1 * we1, :]
            .reshape(n, de1, he1, we1, cop)[:, :do, :ho, :wo, :])

    # ---- conv2 + bn2 (+ downsample) + residual + relu, fused ----
    # TODO(synk): have conv1 write directly into conv2's padded slab layout to
    #             drop this XLA re-layout between the two kernels.
    s2, b2 = _fold_bn(params["g2"], params["b2"], params["m2"], params["v2"])
    w2 = _pack_w3(params["w2"], s2, cop, cop)
    sh2 = _pack_shift(b2, cop)
    y2, meta2 = _phase_flatten(out1, 1)
    grid2, mg_p2 = meta2["grid_dims"], meta2["mg_p"]

    if has_ds:
        sd, bd = _fold_bn(params["gd"], params["bd"], params["md"], params["vd"])
        cdp = _round_up(cin, LANES)
        wdm = jnp.transpose(params["wd"][:, :, 0, 0, 0], (1, 0)) * sd[None, :]
        wdm = jnp.pad(wdm, ((0, cdp - cin), (0, cop - planes))).astype(jnp.bfloat16)
        shd = _pack_shift(bd, cop)
        x_ds = jnp.pad(x_bf[:, ::stride, ::stride, ::stride, :],
                       ((0, 0),) * 4 + ((0, cdp - cin),))
        x_id = _pad_rows_to_grid(x_ds, grid2, mg_p2)
        out2 = _conv3d_call(y2, w2, sh2, meta2, resid=x_id, wd=wdm, shd=shd,
                            relu=True, out_dtype=jnp.bfloat16)
    else:
        # identity residual: specialized add-only path (no eye-matrix matmul)
        x_id = _pad_rows_to_grid(
            jnp.pad(x_bf, ((0, 0),) * 4 + ((0, cop - cin),)), grid2, mg_p2)
        out2 = _conv3d_call(y2, w2, sh2, meta2, resid=x_id,
                            relu=True, out_dtype=jnp.bfloat16)

    de2, he2, we2 = grid2
    out = (out2[:, :de2 * he2 * we2, :]
           .reshape(n, de2, he2, we2, cop)[:, :do, :ho, :wo, :planes])
    return jnp.transpose(out, (0, 4, 1, 2, 3)).astype(jnp.float32)   # back to NCDHW


# ----------------------------- pure-JAX reference -----------------------------

def _ref_block3d(x, p, stride):
    def conv(xx, ww, s, pad):
        return lax.conv_general_dilated(xx, ww, (s,) * 3, [(pad, pad)] * 3,
                                        dimension_numbers=("NCDHW", "OIDHW", "NCDHW"))

    def bn(xx, g, b, m, v):
        sh = (1, -1, 1, 1, 1)
        return (xx - m.reshape(sh)) * (g.reshape(sh) / jnp.sqrt(v.reshape(sh) + EPS)) + b.reshape(sh)

    out = jax.nn.relu(bn(conv(x, p["w1"], stride, 1), p["g1"], p["b1"], p["m1"], p["v1"]))
    out = bn(conv(out, p["w2"], 1, 1), p["g2"], p["b2"], p["m2"], p["v2"])
    if "wd" in p:
        ident = bn(conv(x, p["wd"], stride, 0), p["gd"], p["bd"], p["md"], p["vd"])
    else:
        ident = x
    return jax.nn.relu(out + ident)


# ----------------------------- main -----------------------------

def _make_params(key, cin, planes, stride):
    ks = jax.random.split(key, 20)

    def bn(k0, k1, k2, k3, c):
        return (1.0 + 0.1 * jax.random.normal(k0, (c,), jnp.float32),
                0.1 * jax.random.normal(k1, (c,), jnp.float32),
                0.1 * jax.random.normal(k2, (c,), jnp.float32),
                jax.random.uniform(k3, (c,), jnp.float32, 0.5, 1.5))

    p = {}
    p["w1"] = 0.1 * jax.random.normal(ks[0], (planes, cin, 3, 3, 3), jnp.float32)
    p["g1"], p["b1"], p["m1"], p["v1"] = bn(ks[1], ks[2], ks[3], ks[4], planes)
    p["w2"] = 0.1 * jax.random.normal(ks[5], (planes, planes, 3, 3, 3), jnp.float32)
    p["g2"], p["b2"], p["m2"], p["v2"] = bn(ks[6], ks[7], ks[8], ks[9], planes)
    if stride != 1 or cin != planes:
        p["wd"] = 0.1 * jax.random.normal(ks[10], (planes, cin, 1, 1, 1), jnp.float32)
        p["gd"], p["bd"], p["md"], p["vd"] = bn(ks[11], ks[12], ks[13], ks[14], planes)
    return p


if __name__ == "__main__":
    key = jax.random.PRNGKey(0)
    n, d, h, w = 2, 8, 8, 8
    configs = [
        (4, 8, 2),    # stride-2 downsample block, tiny-Cin (packed-K conv1 path)
        (8, 8, 1),    # identity-residual block, multi Mg-tile path (n_mg = 2)
        (8, 16, 2),   # stride-2 downsample block, multi-phase (s^3 = 8) conv1 path
    ]
    failures = []
    for idx, (cin, planes, stride) in enumerate(configs):
        kparam, kx, key = jax.random.split(key, 3)
        params = _make_params(kparam, cin, planes, stride)
        x = jax.random.normal(kx, (n, cin, d, h, w), jnp.float32)

        out = jax.block_until_ready(block3d_forward(x, params, stride))
        ref = _ref_block3d(x, params, stride)

        assert out.shape == ref.shape, (out.shape, ref.shape)
        max_err = float(jnp.max(jnp.abs(out - ref)))
        rel_err = float(jnp.linalg.norm(out - ref) / (jnp.linalg.norm(ref) + 1e-12))
        # bf16 activations / weights / outputs (f32 MXU accumulation)
        if not (max_err < 2e-1 and rel_err < 3e-2):
            failures.append((idx, max_err, rel_err))

    if failures:
        for idx, me, re in failures:
            print(f"config {idx}: max_abs_err={me:.4f} rel_err={re:.4f}")
        raise AssertionError("Pallas/reference mismatch")
    print("KERNEL_OK")
</pallas_src>

<mosaic_0001>
module attributes {stable_mosaic.version = 11 : i64} {
  func.func @kernel(%arg0: i32, %arg1: i32, %arg2: i32, %arg3: memref<128x128xbf16, #tpu.memory_space<any>>, %arg4: memref<1x128x128xbf16, #tpu.memory_space<vmem>>, %arg5: memref<1x128xf32, #tpu.memory_space<vmem>>, %arg6: memref<1x64x128xbf16, #tpu.memory_space<vmem>>, %arg7: memref<1x64x128xbf16, #tpu.memory_space<vmem>>, %arg8: memref<1x!tpu.dma_semaphore, #tpu.memory_space<semaphore_mem>>) attributes {dimension_semantics = [#tpu.dimension_semantics<parallel>, #tpu.dimension_semantics<parallel>, #tpu.dimension_semantics<parallel>], iteration_bounds = array<i64: 2, 1, 1>, scalar_prefetch = 0 : i64, scratch_operands = 2 : i64, tpu.core_type = #tpu.core_type<tc>, window_params = [{}, {transform_indices = @transform_1, window_bounds = array<i64: 1, 128, 128>}, {transform_indices = @transform_2, window_bounds = array<i64: 1, 128>}, {transform_indices = @transform_3, window_bounds = array<i64: 1, 64, 128>}]} {
    %c64_i32 = arith.constant 64 : i32
    %0 = arith.muli %arg0, %c64_i32 : i32
    %c64_i32_0 = arith.constant 64 : i32
    %1 = arith.muli %arg1, %c64_i32_0 : i32
    %2 = arith.addi %0, %1 : i32
    %c0_i32 = arith.constant 0 : i32
    %3 = arith.addi %2, %c0_i32 : i32
    %4 = tpu.assume_multiple %3, 16 : i32
    %c0_i32_1 = arith.constant 0 : i32
    %c0_i32_2 = arith.constant 0 : i32
    %c0_i32_3 = arith.constant 0 : i32
    %5 = tpu.memref_slice %arg3[%4, %c0_i32_3] : memref<128x128xbf16, #tpu.memory_space<any>> -> memref<64x128xbf16, #tpu.memory_space<any>>
    %c0_i32_4 = arith.constant 0 : i32
    %c0_i32_5 = arith.constant 0 : i32
    %6 = tpu.memref_slice %arg7[%c0_i32_1, %c0_i32_4, %c0_i32_5] : memref<1x64x128xbf16, #tpu.memory_space<vmem>> -> memref<1x64x128xbf16, #tpu.memory_space<vmem>>
    %7 = tpu.memref_squeeze %6 : memref<1x64x128xbf16, #tpu.memory_space<vmem>> -> memref<64x128xbf16, #tpu.memory_space<vmem>>
    %8 = tpu.memref_slice %arg8[%c0_i32_2] : memref<1x!tpu.dma_semaphore, #tpu.memory_space<semaphore_mem>> -> memref<1x!tpu.dma_semaphore, #tpu.memory_space<semaphore_mem>>
    %9 = tpu.memref_squeeze %8 : memref<1x!tpu.dma_semaphore, #tpu.memory_space<semaphore_mem>> -> memref<!tpu.dma_semaphore, #tpu.memory_space<semaphore_mem>>
    tpu.enqueue_dma source(%5 : memref<64x128xbf16, #tpu.memory_space<any>>) target(%7 : memref<64x128xbf16, #tpu.memory_space<vmem>>) target_semaphore(%9 : memref<!tpu.dma_semaphore, #tpu.memory_space<semaphore_mem>>)
    %c0_i32_6 = arith.constant 0 : i32
    %c0_i32_7 = arith.constant 0 : i32
    %c0_i32_8 = arith.constant 0 : i32
    %10 = tpu.memref_slice %arg3[%4, %c0_i32_8] : memref<128x128xbf16, #tpu.memory_space<any>> -> memref<64x128xbf16, #tpu.memory_space<any>>
    %c0_i32_9 = arith.constant 0 : i32
    %c0_i32_10 = arith.constant 0 : i32
    %11 = tpu.memref_slice %arg7[%c0_i32_6, %c0_i32_9, %c0_i32_10] : memref<1x64x128xbf16, #tpu.memory_space<vmem>> -> memref<1x64x128xbf16, #tpu.memory_space<vmem>>
    %12 = tpu.memref_squeeze %11 : memref<1x64x128xbf16, #tpu.memory_space<vmem>> -> memref<64x128xbf16, #tpu.memory_space<vmem>>
    %13 = tpu.memref_slice %arg8[%c0_i32_7] : memref<1x!tpu.dma_semaphore, #tpu.memory_space<semaphore_mem>> -> memref<1x!tpu.dma_semaphore, #tpu.memory_space<semaphore_mem>>
    %14 = tpu.memref_squeeze %13 : memref<1x!tpu.dma_semaphore, #tpu.memory_space<semaphore_mem>> -> memref<!tpu.dma_semaphore, #tpu.memory_space<semaphore_mem>>
    tpu.wait_dma2 semaphore(%14 : memref<!tpu.dma_semaphore, #tpu.memory_space<semaphore_mem>>) src(%10 : memref<64x128xbf16, #tpu.memory_space<any>>) dst(%12 : memref<64x128xbf16, #tpu.memory_space<vmem>>)
    %c0 = arith.constant 0 : index
    %c0_11 = arith.constant 0 : index
    %c0_12 = arith.constant 0 : index
    %15 = vector.load %arg7[%c0, %c0_11, %c0_12] : memref<1x64x128xbf16, #tpu.memory_space<vmem>>, vector<1x64x128xbf16>
    %16 = vector.shape_cast %15 : vector<1x64x128xbf16> to vector<64x128xbf16>
    %c0_13 = arith.constant 0 : index
    %c0_14 = arith.constant 0 : index
    %c0_15 = arith.constant 0 : index
    %17 = vector.load %arg4[%c0_13, %c0_14, %c0_15] : memref<1x128x128xbf16, #tpu.memory_space<vmem>>, vector<1x128x128xbf16>
    %18 = vector.shape_cast %17 : vector<1x128x128xbf16> to vector<128x128xbf16>
    %cst = arith.constant dense<0.000000e+00> : vector<64x128xf32>
    %19 = tpu.matmul %16, %18, %cst {dimension_numbers = #tpu.dot_dimension_numbers<[1], [0], [0], [1], [0, 0, 1, 1], [], []>} : vector<64x128xbf16>, vector<128x128xbf16>, vector<64x128xf32> -> vector<64x128xf32>
    %c0_16 = arith.constant 0 : index
    %c0_17 = arith.constant 0 : index
    %20 = vector.load %arg5[%c0_16, %c0_17] : memref<1x128xf32, #tpu.memory_space<vmem>>, vector<1x128xf32>
    %21 = vector.broadcast %20 : vector<1x128xf32> to vector<64x128xf32>
    %22 = arith.addf %19, %21 : vector<64x128xf32>
    %cst_18 = arith.constant 0.000000e+00 : f32
    %23 = vector.broadcast %cst_18 : f32 to vector<64x128xf32>
    %24 = arith.maximumf %22, %23 : vector<64x128xf32>
    %25 = arith.truncf %24 : vector<64x128xf32> to vector<64x128xbf16>
    %c0_19 = arith.constant 0 : index
    %c0_20 = arith.constant 0 : index
    %c0_21 = arith.constant 0 : index
    %26 = vector.load %arg6[%c0_19, %c0_20, %c0_21] : memref<1x64x128xbf16, #tpu.memory_space<vmem>>, vector<1x64x128xbf16>
    %27 = vector.shape_cast %26 : vector<1x64x128xbf16> to vector<64x128xbf16>
    %28 = vector.shape_cast %25 : vector<64x128xbf16> to vector<1x64x128xbf16>
    tpu.vector_store %arg6[%c0_19, %c0_20, %c0_21], %28 {strides = array<i32>} : memref<1x64x128xbf16, #tpu.memory_space<vmem>>, vector<1x64x128xbf16>,
    return
  }
  func.func @transform_1(%arg0: i32, %arg1: i32, %arg2: i32) -> (i32, i32, i32) {
    %c0_i32 = arith.constant 0 : i32
    %c0_i32_0 = arith.constant 0 : i32
    %c0_i32_1 = arith.constant 0 : i32
    return %c0_i32, %c0_i32_0, %arg2 : i32, i32, i32
  }
  func.func @transform_2(%arg0: i32, %arg1: i32, %arg2: i32) -> (i32, i32) {
    %c0_i32 = arith.constant 0 : i32
    %c0_i32_0 = arith.constant 0 : i32
    return %c0_i32, %arg2 : i32, i32
  }
  func.func @transform_3(%arg0: i32, %arg1: i32, %arg2: i32) -> (i32, i32, i32) {
    %c0_i32 = arith.constant 0 : i32
    return %arg0, %arg1, %arg2 : i32, i32, i32
  }
}

</mosaic_0001>

<llo_original>
// kernel: tpu_custom_call.1
$region0: #{tpu_custom_call.1}
  #allocation0 [shape = 'u32[]', space=smem, size = 0x4, offset = 0x4, fixed_abs, tag = 'smem constant byte address 0x4 - core index']
  #allocation1 [shape = 'u32[72,128]{1,0:T(1,128)}', space=vmem, size = 0x9000, scoped, tag = 'internal scratch']
  #allocation2 [shape = 'bf16[1,64,128]{2,1,0:T(8,128)(2,1)}', space=vmem, size = 0x4000, scoped, tag = 'scratch operand']
  #allocation3 [shape = 's32[1]{0}', space=sflag, size = 0x4, scoped, tag = 'scratch operand']
  #allocation8 [shape = 's32[]', space=sflag, size = 0x4, offset = 0, fixed_abs, tag = 'sflag constant byte address 0x0 - dummy sync flag']
  #allocation9 [shape = 's32[]', space=sflag, size = 0x4, offset = 0, fixed_abs, tag = 'sflag constant byte address 0x0 - dummy sync flag']
  #allocation10 [shape = 'u32[]', space=smem, size = 0x4, offset = 0x44, fixed_abs, tag = 'smem constant byte address 0x44 - assertion arg 0']
  #allocation11 [shape = 'u32[]', space=smem, size = 0x4, offset = 0x48, fixed_abs, tag = 'smem constant byte address 0x48 - assertion arg 1']
  %s0 = inlined_call_operand.hbm [shape: bf16[128,128], index: 0, kind: input, shape index: {}]
  %s1 = inlined_call_operand.hbm [shape: bf16[1,128,128], index: 1, kind: input, shape index: {}]
  %s2 = inlined_call_operand.vmem [shape: f32[1,128], index: 2, kind: input, shape index: {}]
  %s3 = inlined_call_operand.hbm [shape: bf16[2,64,128], index: 3, kind: output, shape index: {}]
  %s4 = sld [smem:[#allocation0]]
  $region49: #{tpu_custom_call.1} parent=0
    _
  %s6 = ssub.s32 1, %s4
  %s7 = scalar_select 0, %s6, %s4
  $region1: #{tpu_custom_call.1} parent=0
    #allocation4 [shape = 'u8[32768]{0}', space=vmem, size = 0x8000, scoped, tag = 'input window, operand 1, single buffered']
    #allocation5 [shape = 's32[2]{0}', space=sflag, size = 0x8, scoped, tag = 'scoped memory for tpu_custom_call.1']
    #allocation6 [shape = 's32[2]{0}', space=sflag, size = 0x8, scoped, tag = 'scoped memory for tpu_custom_call.1']
    #allocation7 [shape = 'u8[32768]{0}', space=vmem, size = 0x8000, scoped, tag = 'output window, operand 0']
    %8 = vsyncpa [#allocation5], 0
    %9 = vsyncpa [#allocation6], 0
    %s10 = scalar_lea.sflag [#allocation6], 1
    %11 = vsyncpa %s10, 0
    loop: start=0, step=1, limit=4
    $region2: #{tpu_custom_call.1} parent=1 // loop_pre_header
      _
    $region3: #{tpu_custom_call.1} parent=1 // loop_header
      %s13 = sphi 0, %s17
      %p14 = scmp.ge.s32.totalorder %s13, 4
      %s20 = sphi 0, %s39
      %s21 = sphi 0, %s35
      %s22 = sphi 0, %s31
      %s23 = sphi 0, %s20
      %s24 = sphi 0, %s21
      %s25 = sphi 0, %s22
      %s26 = sphi 0, %s23
      %s27 = sphi 0, %s24
      %s28 = sphi 0, %s25
      %s42 = sphi 0, %s44
      %s45 = sphi 0, %s42
      %s46 = sphi 0, %s45
      %s62 = sphi 0, %s46
      %s68 = sphi 0, %s70
      %s71 = sphi 0, %s68
      %s72 = sphi 0, %s71
      %s88 = sphi 0, %s72
      %s98 = sphi 0, %s100
      %s101 = sphi 0, %s98
      %s102 = sphi 0, %s101
      %s118 = sphi 0, %s102
    $region4: #{tpu_custom_call.1} parent=1 // loop_header_branch
      %16 = sbr.rel (%p14) target = $region8
    $region5: #{tpu_custom_call.1} parent=1 // loop_body
      %s18 = ssub.s32 %s13, 1
      %s19 = ssub.s32 %s13, 2
      %s29 = sadd.s32 1, %s22
      %p30 = scmp.ge.s32.totalorder %s29, 1
      %s31 = scalar_select %p30, 0, %s29
      %s32 = sadd.s32 1, %s21
      %s33 = scalar_select %p30, %s32, %s21
      %p34 = scmp.ge.s32.totalorder %s33, 1
      %s35 = scalar_select %p34, 0, %s33
      %s36 = sadd.s32 1, %s20
      %s37 = scalar_select %p34, %s36, %s20
      %p38 = scmp.ge.s32.totalorder %s37, 2
      %s39 = scalar_select %p38, 0, %s37
      %s40 = ssub.s32 %s22, %s31
      %p41 = scmp.eq.s32.totalorder %s40, 0
      %s43 = sadd.s32 %s42, 1
      %s44 = scalar_select %p41, %s42, %s43
      %p47 = pneg %p41
      %p48 = scmp.eq.s32.totalorder %s13, 1
      %p49 = por %p47, %p48
      %p50 = scmp.ne.s32.totalorder %s42, %s45
      %p51 = scmp.eq.s32.totalorder %s13, 0
      %p52 = por %p50, %p51
      %p53 = scmp.ne.s32.totalorder %s42, %s45
      %p54 = scmp.eq.s32.totalorder %s18, 1
      %p55 = por %p53, %p54
      %p56 = scmp.ne.s32.totalorder %s45, %s46
      %p57 = scmp.eq.s32.totalorder %s18, 0
      %p58 = por %p56, %p57
      %p59 = scmp.ne.s32.totalorder %s45, %s46
      %p60 = scmp.eq.s32.totalorder %s19, 1
      %p61 = por %p59, %p60
      %p63 = scmp.ne.s32.totalorder %s46, %s62
      %p64 = scmp.eq.s32.totalorder %s19, 0
      %p65 = por %p63, %p64
      %s66 = ssub.s32 %s22, %s31
      %p67 = scmp.eq.s32.totalorder %s66, 0
      %s69 = sadd.s32 %s68, 1
      %s70 = scalar_select %p67, %s68, %s69
      %p73 = pneg %p67
      %p74 = scmp.eq.s32.totalorder %s13, 1
      %p75 = por %p73, %p74
      %p76 = scmp.ne.s32.totalorder %s68, %s71
      %p77 = scmp.eq.s32.totalorder %s13, 0
      %p78 = por %p76, %p77
      %p79 = scmp.ne.s32.totalorder %s68, %s71
      %p80 = scmp.eq.s32.totalorder %s18, 1
      %p81 = por %p79, %p80
      %p82 = scmp.ne.s32.totalorder %s71, %s72
      %p83 = scmp.eq.s32.totalorder %s18, 0
      %p84 = por %p82, %p83
      %p85 = scmp.ne.s32.totalorder %s71, %s72
      %p86 = scmp.eq.s32.totalorder %s19, 1
      %p87 = por %p85, %p86
      %p89 = scmp.ne.s32.totalorder %s72, %s88
      %p90 = scmp.eq.s32.totalorder %s19, 0
      %p91 = por %p89, %p90
      %s92 = ssub.s32 %s20, %s39
      %s93 = ssub.s32 %s21, %s35
      %s94 = sor.u32 %s92, %s93
      %s95 = ssub.s32 %s22, %s31
      %s96 = sor.u32 %s94, %s95
      %p97 = scmp.eq.s32.totalorder %s96, 0
      %s99 = sadd.s32 %s98, 1
      %s100 = scalar_select %p97, %s98, %s99
      %p103 = pneg %p97
      %p104 = scmp.eq.s32.totalorder %s13, 1
      %p105 = por %p103, %p104
      %p106 = scmp.ne.s32.totalorder %s98, %s101
      %p107 = scmp.eq.s32.totalorder %s13, 0
      %p108 = por %p106, %p107
      %p109 = scmp.ne.s32.totalorder %s98, %s101
      %p110 = scmp.eq.s32.totalorder %s18, 1
      %p111 = por %p109, %p110
      %p112 = scmp.ne.s32.totalorder %s101, %s102
      %p113 = scmp.eq.s32.totalorder %s18, 0
      %p114 = por %p112, %p113
      %p115 = scmp.ne.s32.totalorder %s101, %s102
      %p116 = scmp.eq.s32.totalorder %s19, 1
      %p117 = por %p115, %p116
      %p119 = scmp.ne.s32.totalorder %s102, %s118
      %p120 = scmp.eq.s32.totalorder %s19, 0
      %p121 = por %p119, %p120
      %p122 = scmp.le.s32.totalorder 1, %s13
      %p123 = scmp.lt.s32.totalorder %s13, 3
      %p124 = pnand %p122, %p123
      %p125 = pneg %p124
      // Predicated region
      $region9: #{tpu_custom_call.1} parent=5 // pred_check
        _
      $region10: #{tpu_custom_call.1} parent=5 // pred_check_branch
        %127 = sbr.rel (%p124) target = $region12
      $region11: #{tpu_custom_call.1} parent=5 // pred_region
        %s128 = ssub.s32 %s13, 1
        // Predicated region
        $region13: #{tpu_custom_call.1} parent=11 // pred_check
          %p129 = pneg %p58
        $region14: #{tpu_custom_call.1} parent=11 // pred_check_branch
          %131 = sbr.rel (%p129) target = $region16
        $region15: #{tpu_custom_call.1} parent=11 // pred_region
          %133 = vsyncadd [#allocation5], 0
          %s134 = smul.addr %s25, 4
          %s135 = scalar_lea.hbm %s1, %s134
          %s136 = sshll.u32 %s135, 4
          %s137 = int_to_ptr.hbm [resolvable:$true] %s136
          %s138 = sshll.u32 [#allocation4], 4
          %s139 = int_to_ptr.vmem [resolvable:$true] %s138
          %144 = dma.hbm_to_vmem [thread:$0]  %s137, 1024, %s139, [#allocation5], 64, 64, 4
        $region16: #{tpu_custom_call.1} parent=11 // pred_fallthru
          _
        // Predicated region
        $region17: #{tpu_custom_call.1} parent=11 // pred_check
          %p145 = pneg %p84
        $region18: #{tpu_custom_call.1} parent=11 // pred_check_branch
          %147 = sbr.rel (%p145) target = $region20
        $region19: #{tpu_custom_call.1} parent=11 // pred_region
          %p148 = scmp.lt.s32.totalorder %s25, 0
          %s149 = scalar_select %p148, %s25, 0
          %s150 = scalar_lea.vmem %s2, %s149
        $region20: #{tpu_custom_call.1} parent=11 // pred_fallthru
          _
      $region12: #{tpu_custom_call.1} parent=5 // pred_fallthru
        _
      %p151 = scmp.lt.s32.totalorder %s13, 2
      // Predicated region
      $region21: #{tpu_custom_call.1} parent=5 // pred_check
        %p152 = pneg %p151
      $region22: #{tpu_custom_call.1} parent=5 // pred_check_branch
        %154 = sbr.rel (%p152) target = $region24
      $region23: #{tpu_custom_call.1} parent=5 // pred_region
        _
      $region24: #{tpu_custom_call.1} parent=5 // pred_fallthru
        _
      %p155 = scmp.le.s32.totalorder 1, %s13
      %p156 = scmp.lt.s32.totalorder %s13, 3
      %p157 = pnand %p155, %p156
      %p158 = pneg %p157
      // Predicated region
      $region25: #{tpu_custom_call.1} parent=5 // pred_check
        _
      $region26: #{tpu_custom_call.1} parent=5 // pred_check_branch
        %160 = sbr.rel (%p157) target = $region28
      $region27: #{tpu_custom_call.1} parent=5 // pred_region
        %s161 = ssub.s32 %s13, 1
        // Predicated region
        $region29: #{tpu_custom_call.1} parent=27 // pred_check
          %p162 = pneg %p58
        $region30: #{tpu_custom_call.1} parent=27 // pred_check_branch
          %164 = sbr.rel (%p162) target = $region32
        $region31: #{tpu_custom_call.1} parent=27 // pred_region
          %166 = dma.done [#allocation5], 1024
        $region32: #{tpu_custom_call.1} parent=27 // pred_fallthru
          _
        %p167 = pneg %p58
        %p168 = pneg %p55
        %p169 = scmp.lt.s32.totalorder %s25, 0
        %s170 = scalar_select %p169, %s25, 0
        %s171 = scalar_lea.vmem %s2, %s170
        %p172 = pneg %p84
        %p173 = pneg %p81
        %p174 = pneg %p114
        %p175 = pneg %p111
        %s176 = sand.u32 %s101, 1
        %s177 = scalar_lea.sflag [#allocation6], %s176
        %s178 = sand.u32 %s101, 1
        %s179 = smul.addr %s178, 32
        %s180 = scalar_lea.vmem [#allocation7], %s179
        %p181 = scmp.lt.s32.totalorder %s25, 0
        %s182 = scalar_select %p181, %s25, 0
        %s183 = scalar_lea.vmem %s2, %s182
        %s184 = smul.u32 8, %s24
        %s185 = smul.u32 %s23, 64
        %s186 = smul.u32 %s24, 64
        %s187 = sadd.s32 %s185, %s186
        %s188 = sshra.s32 %s187, 3
        %s189 = sand.u32 %s187, 7
        %s190 = smul.addr %s188, 4
        %s191 = scalar_lea.hbm %s0, %s190
        // Predicated region
        $region33: #{tpu_custom_call.1} parent=27 // pred_check
          _
        $region34: #{tpu_custom_call.1} parent=27 // pred_check_branch
          %193 = sbr.rel target = $region36
        $region35: #{tpu_custom_call.1} parent=27 // pred_region
          %194 = sst [smem:[#allocation10]] [#allocation9]
          %195 = sst [smem:[#allocation11]] [#allocation8]
        $region36: #{tpu_custom_call.1} parent=27 // pred_fallthru
          _
        %197 = shalt.err (0)
        %s199 = sshll.u32 %s191, 4
        %s200 = int_to_ptr.hbm [resolvable:$true] %s199
        %s201 = sshll.u32 [#allocation2], 4
        %s202 = int_to_ptr.vmem [resolvable:$true] %s201
        %204 = dma.hbm_to_vmem [thread:$0]  %s200, 512, %s202, [#allocation3]
        %s205 = smul.u32 4, 8
        %s206 = smul.u32 %s205, 1
        %s207 = sshll.u32 %s206, 4
        %208 = dma.done [#allocation3], %s207
        %v209 = vld [vmem:[#allocation2] sm:$0xf]
        %v210 = vld [vmem:[#allocation2 + $0x4] sm:$0xf]
        %v211 = vld [vmem:[#allocation2 + $0x8] sm:$0xf]
        %v212 = vld [vmem:[#allocation2 + $0xc] sm:$0xf]
        %v213 = vld [vmem:[#allocation2 + $0x10] sm:$0xf]
        %v214 = vld [vmem:[#allocation2 + $0x14] sm:$0xf]
        %v215 = vld [vmem:[#allocation2 + $0x18] sm:$0xf]
        %v216 = vld [vmem:[#allocation2 + $0x1c] sm:$0xf]
        %v217 = vld [vmem:[#allocation4] sm:$0xf]
        %v218 = vld [vmem:[#allocation4 + $0x4] sm:$0xf]
        %v219 = vld [vmem:[#allocation4 + $0x8] sm:$0xf]
        %v220 = vld [vmem:[#allocation4 + $0xc] sm:$0xf]
        %v221 = vld [vmem:[#allocation4 + $0x10] sm:$0xf]
        %v222 = vld [vmem:[#allocation4 + $0x14] sm:$0xf]
        %v223 = vld [vmem:[#allocation4 + $0x18] sm:$0xf]
        %v224 = vld [vmem:[#allocation4 + $0x1c] sm:$0xf]
        %v225 = vld [vmem:[#allocation4 + $0x20] sm:$0xf]
        %v226 = vld [vmem:[#allocation4 + $0x24] sm:$0xf]
        %v227 = vld [vmem:[#allocation4 + $0x28] sm:$0xf]
        %v228 = vld [vmem:[#allocation4 + $0x2c] sm:$0xf]
        %v229 = vld [vmem:[#allocation4 + $0x30] sm:$0xf]
        %v230 = vld [vmem:[#allocation4 + $0x34] sm:$0xf]
        %v231 = vld [vmem:[#allocation4 + $0x38] sm:$0xf]
        %v232 = vld [vmem:[#allocation4 + $0x3c] sm:$0xf]
        %v233 = vld [vmem:[%s183] sm:$0x1]
        %v235 = vperm.slane %v233, 0
        %v245 = vunpack.c.l.b16 %v209
        %v246 = vunpack.c.l.b16 %v210
        %v247 = vunpack.c.l.b16 %v211
        %v248 = vunpack.c.l.b16 %v212
        %v249 = vunpack.c.l.b16 %v213
        %v250 = vunpack.c.l.b16 %v214
        %v251 = vunpack.c.l.b16 %v215
        %v252 = vunpack.c.l.b16 %v216
        %v253 = vpack.c.b16 %v246, %v245
        %v254 = vpack.c.b16 %v248, %v247
        %v255 = vpack.c.b16 %v250, %v249
        %v256 = vpack.c.b16 %v252, %v251
        %v277 = vunpack.c.l.b16 %v217
        %v278 = vunpack.c.l.b16 %v218
        %v279 = vunpack.c.l.b16 %v219
        %v280 = vunpack.c.l.b16 %v220
        %v281 = vunpack.c.l.b16 %v221
        %v282 = vunpack.c.l.b16 %v222
        %v283 = vunpack.c.l.b16 %v223
        %v284 = vunpack.c.l.b16 %v224
        %v285 = vunpack.c.l.b16 %v225
        %v286 = vunpack.c.l.b16 %v226
        %v287 = vunpack.c.l.b16 %v227
        %v288 = vunpack.c.l.b16 %v228
        %v289 = vunpack.c.l.b16 %v229
        %v290 = vunpack.c.l.b16 %v230
        %v291 = vunpack.c.l.b16 %v231
        %v292 = vunpack.c.l.b16 %v232
        %v293 = vpack.c.b16 %v278, %v277
        %v294 = vpack.c.b16 %v280, %v279
        %v295 = vpack.c.b16 %v282, %v281
        %v296 = vpack.c.b16 %v284, %v283
        %v297 = vpack.c.b16 %v286, %v285
        %v298 = vpack.c.b16 %v288, %v287
        %v299 = vpack.c.b16 %v290, %v289
        %v300 = vpack.c.b16 %v292, %v291
        %309 = vmatpush.bf16.msra.mxu0 %v300
        %310 = vmatpush.bf16.msra.mxu0 %v299
        %311 = vmatpush.bf16.msra.mxu0 %v298
        %312 = vmatpush.bf16.msra.mxu0 %v297
        %313 = vmatpush.bf16.msra.mxu0 %v296
        %314 = vmatpush.bf16.msra.mxu0 %v295
        %315 = vmatpush.bf16.msra.mxu0 %v294
        %316 = vmatpush.bf16.msra.mxu0 %v293
        %317 = vmatmul.bf16.gmra.mxu0 %v253
        %v318 = vpop.f32.mrf.mxu0
        %v319 = vadd.f32 %v235, %v318
        %v320 = vpop.f32.mrf.mxu0
        %v321 = vadd.f32 %v235, %v320
        %322 = vmatmul.bf16.gmra.mxu0 %v254
        %v323 = vpop.f32.mrf.mxu0
        %v324 = vadd.f32 %v235, %v323
        %v325 = vpop.f32.mrf.mxu0
        %v326 = vadd.f32 %v235, %v325
        %327 = vmatmul.bf16.gmra.mxu0 %v255
        %v328 = vpop.f32.mrf.mxu0
        %v329 = vadd.f32 %v235, %v328
        %v330 = vpop.f32.mrf.mxu0
        %v331 = vadd.f32 %v235, %v330
        %332 = vmatmul.bf16.gmra.mxu0 %v256
        %v333 = vpop.f32.mrf.mxu0
        %v334 = vadd.f32 %v235, %v333
        %v335 = vpop.f32.mrf.mxu0
        %v336 = vadd.f32 %v235, %v335
        %337 = vdwg.mxu0
        %v338 = vmax.f32 %v319, 0.0
        %v339 = vmax.f32 %v321, 0.0
        %v340 = vmax.f32 %v324, 0.0
        %v341 = vmax.f32 %v326, 0.0
        %v342 = vmax.f32 %v329, 0.0
        %v343 = vmax.f32 %v331, 0.0
        %v344 = vmax.f32 %v334, 0.0
        %v345 = vmax.f32 %v336, 0.0
        %v346 = vpack.c.bf16 %v338, %v338
        %v347 = vpack.c.bf16 %v339, %v339
        %v348 = vpack.c.bf16 %v340, %v340
        %v349 = vpack.c.bf16 %v341, %v341
        %v350 = vpack.c.bf16 %v342, %v342
        %v351 = vpack.c.bf16 %v343, %v343
        %v352 = vpack.c.bf16 %v344, %v344
        %v353 = vpack.c.bf16 %v345, %v345
        %354 = vst [vmem:[%s180] sm:$0xf] %v346
        %355 = vst [vmem:[%s180 + $0x4] sm:$0xf] %v347
        %356 = vst [vmem:[%s180 + $0x8] sm:$0xf] %v348
        %357 = vst [vmem:[%s180 + $0xc] sm:$0xf] %v349
        %358 = vst [vmem:[%s180 + $0x10] sm:$0xf] %v350
        %359 = vst [vmem:[%s180 + $0x14] sm:$0xf] %v351
        %360 = vst [vmem:[%s180 + $0x18] sm:$0xf] %v352
        %361 = vst [vmem:[%s180 + $0x1c] sm:$0xf] %v353
        %s362 = sand.u32 %s101, 1
        %s363 = scalar_lea.sflag [#allocation6], %s362
        %s364 = sand.u32 %s101, 1
        %s365 = smul.addr %s364, 32
        %s366 = scalar_lea.vmem [#allocation7], %s365
        // Predicated region
        $region37: #{tpu_custom_call.1} parent=27 // pred_check
          %p367 = pneg %p111
        $region38: #{tpu_custom_call.1} parent=27 // pred_check_branch
          %369 = sbr.rel (%p367) target = $region40
        $region39: #{tpu_custom_call.1} parent=27 // pred_region
          %s370 = smul.u32 8, %s24
          %372 = vsyncadd %s363, 0
          %s373 = sadd.s32 %s25, %s370
          %s374 = smul.addr %s23, 8
          %s375 = sadd.s32 %s373, %s374
          %s376 = smul.addr %s375, 4
          %s377 = scalar_lea.hbm %s3, %s376
          %s378 = sshll.u32 %s366, 4
          %s379 = int_to_ptr.vmem [resolvable:$true] %s378
          %s380 = sshll.u32 %s377, 4
          %s381 = int_to_ptr.hbm [resolvable:$true] %s380
          %386 = dma.vmem_to_hbm [thread:$0]  %s379, 512, %s381, %s363, 64, 64, 4
        $region40: #{tpu_custom_call.1} parent=27 // pred_fallthru
          _
      $region28: #{tpu_custom_call.1} parent=5 // pred_fallthru
        _
      %p387 = scmp.le.s32.totalorder 2, %s13
      // Predicated region
      $region41: #{tpu_custom_call.1} parent=5 // pred_check
        %p388 = pneg %p387
      $region42: #{tpu_custom_call.1} parent=5 // pred_check_branch
        %390 = sbr.rel (%p388) target = $region44
      $region43: #{tpu_custom_call.1} parent=5 // pred_region
        %s391 = ssub.s32 %s13, 2
        // Predicated region
        $region45: #{tpu_custom_call.1} parent=43 // pred_check
          %p392 = pneg %p117
        $region46: #{tpu_custom_call.1} parent=43 // pred_check_branch
          %394 = sbr.rel (%p392) target = $region48
        $region47: #{tpu_custom_call.1} parent=43 // pred_region
          %s395 = sand.u32 %s102, 1
          %s396 = scalar_lea.sflag [#allocation6], %s395
          %s397 = sand.u32 %s102, 1
          %s398 = smul.addr %s397, 32
          %s399 = scalar_lea.vmem [#allocation7], %s398
          %401 = dma.done %s396, 512
        $region48: #{tpu_custom_call.1} parent=43 // pred_fallthru
          _
      $region44: #{tpu_custom_call.1} parent=5 // pred_fallthru
        _
    $region6: #{tpu_custom_call.1} parent=1 // loop_footer
      %s17 = sadd.s32 1, %s13
    $region7: #{tpu_custom_call.1} parent=1 // loop_footer_branch
      %12 = sbr.rel target = $region3
    $region8: #{tpu_custom_call.1} parent=1 // loop_exit
      _
    %402 = vsyncpa [#allocation5], 1
    %s403 = scalar_lea.sflag [#allocation5], 1
    %404 = vsyncpa %s403, 1
    %405 = vsyncpa [#allocation6], 1
    %s406 = scalar_lea.sflag [#allocation6], 1
    %407 = vsyncpa %s406, 1
  %408 = vsyncmov [#allocation3]
  %s409 = vpop.sfrf %408
  %p410 = scmp.eq.s32.totalorder %s409, 0
  %p411 = pneg %p410
  %413 = shalt.err (%p411)

</llo_original>
